<compile_context>
chip_gen: v5e
topology: v5e:2x2
jax: 0.10.0
libtpu: 0.0.40
codegen_flags: <defaults>
</compile_context>

<pallas_src>
import jax
import jax.numpy as jnp
from jax.experimental import pallas as pl
from jax.experimental.pallas import tpu as pltpu

_LANES = 128
_SIXTH = 0.16666666666666666


def _hard_swish_kernel(x_ref, o_ref):
    x = x_ref[...]
    # f32 compute (safe on v5e, which has no bf16 VPU); DMA-bound so the
    # up/down cast is free.  Pure VPU elementwise: add, clamp, 2x mul.
    xf = x.astype(jnp.float32)
    y = xf * (jnp.clip(xf + 3.0, 0.0, 6.0) * _SIXTH)
    o_ref[...] = y.astype(o_ref.dtype)


def _hard_swish_jnp(x):
    xf = x.astype(jnp.float32)
    return (xf * (jnp.clip(xf + 3.0, 0.0, 6.0) * _SIXTH)).astype(x.dtype)


def _vmem_capacity_bytes():
    try:
        return int(pltpu.get_tpu_info().vmem_capacity_bytes)
    except Exception:
        return 64 << 20  # conservative (v7x-sized) fallback


def hard_swish(x):
    """Applies hard-swish elementwise; preserves shape and dtype."""
    orig_shape = x.shape
    orig_dtype = x.dtype
    n = x.size
    if n == 0:
        return x
    itemsize = jnp.dtype(orig_dtype).itemsize

    x_flat = jnp.ravel(x)
    main = (n // _LANES) * _LANES   # part handled by the Pallas kernel
    tail = n - main                 # <128 leftover elements, plain jnp

    pieces = []
    if main > 0:
        rows = main // _LANES
        x2d = (x_flat if tail == 0 else x_flat[:main]).reshape(rows, _LANES)

        vmem_cap = _vmem_capacity_bytes()
        target_block_bytes = 8 << 20           # ~8 MiB per block, all gens
        if vmem_cap <= (64 << 20):
            vmem_limit = 40 << 20              # v7x-class: 64 MiB physical
        else:
            vmem_limit = 64 << 20              # v5e/v6e: 128 MiB physical

        # Sublane packing granularity: 8 rows (4-byte), 16 (2-byte), 32 (1-byte).
        sub = max(8, 32 // max(itemsize, 1))
        target_rows = max(sub, target_block_bytes // (_LANES * itemsize))
        if rows <= sub:
            tr = rows                           # full-extent block, always legal
        else:
            tr = min(target_rows, rows)
            tr = max(sub, (tr // sub) * sub)    # keep (8,128)-tile aligned

        grid = (pl.cdiv(rows, tr),)             # ragged last block is masked

        cost = pl.CostEstimate(
            flops=4 * main,                     # add, clamp(2), mul(2) approx
            transcendentals=0,
            bytes_accessed=2 * main * itemsize,
        )

        out2d = pl.pallas_call(
            _hard_swish_kernel,
            out_shape=jax.ShapeDtypeStruct((rows, _LANES), orig_dtype),
            grid_spec=pltpu.PrefetchScalarGridSpec(
                num_scalar_prefetch=0,
                grid=grid,
                in_specs=[pl.BlockSpec((tr, _LANES), lambda i: (i, 0))],
                out_specs=pl.BlockSpec((tr, _LANES), lambda i: (i, 0)),
            ),
            compiler_params=pltpu.CompilerParams(
                dimension_semantics=("parallel",),
                vmem_limit_bytes=vmem_limit,
            ),
            cost_estimate=cost,
        )(x2d)
        pieces.append(out2d.reshape(-1))

    if tail > 0:
        pieces.append(_hard_swish_jnp(x_flat[main:]))

    out_flat = pieces[0] if len(pieces) == 1 else jnp.concatenate(pieces)
    return out_flat.reshape(orig_shape)


def _ref_hard_swish(x):
    xf = x.astype(jnp.float32)
    return (xf * (jnp.clip(xf + 3.0, 0.0, 6.0) / 6.0)).astype(x.dtype)


if __name__ == "__main__":
    key = jax.random.PRNGKey(0)

    # NCHW input consistent with typical conv activations (lane-divisible).
    x = jax.random.normal(key, (2, 4, 16, 16), dtype=jnp.float32) * 4.0
    y = hard_swish(x)
    jax.block_until_ready(y)
    assert y.shape == x.shape and y.dtype == x.dtype
    assert jnp.allclose(y, _ref_hard_swish(x), atol=1e-6), "f32 mismatch"

    # Ragged size (exercises the pad-free main+tail path).
    x2 = jax.random.normal(jax.random.PRNGKey(1), (3, 5, 7, 11),
                           dtype=jnp.float32) * 4.0
    y2 = hard_swish(x2)
    jax.block_until_ready(y2)
    assert y2.shape == x2.shape and y2.dtype == x2.dtype
    assert jnp.allclose(y2, _ref_hard_swish(x2), atol=1e-6), "ragged mismatch"

    # Tiny (<128 elements) input: pure-jnp tail-only path.
    x4 = jax.random.normal(jax.random.PRNGKey(3), (3, 5), dtype=jnp.float32) * 4.0
    y4 = hard_swish(x4)
    jax.block_until_ready(y4)
    assert jnp.allclose(y4, _ref_hard_swish(x4), atol=1e-6), "tiny mismatch"

    # bf16 end-to-end (half the HBM traffic; f32 math inside the kernel).
    x3 = (jax.random.normal(jax.random.PRNGKey(2), (2, 4, 16, 16),
                            dtype=jnp.float32) * 4.0).astype(jnp.bfloat16)
    y3 = hard_swish(x3)
    jax.block_until_ready(y3)
    assert y3.shape == x3.shape and y3.dtype == x3.dtype
    assert jnp.allclose(y3.astype(jnp.float32),
                        _ref_hard_swish(x3).astype(jnp.float32),
                        atol=2e-2), "bf16 mismatch"

    print("KERNEL_OK")
</pallas_src>

<mosaic_0001>
module attributes {stable_mosaic.version = 11 : i64} {
  func.func @_hard_swish_kernel(%arg0: i32, %arg1: memref<16x128xf32, #tpu.memory_space<vmem>>, %arg2: memref<16x128xf32, #tpu.memory_space<vmem>>) attributes {dimension_semantics = [#tpu.dimension_semantics<parallel>], iteration_bounds = array<i64: 1>, scalar_prefetch = 0 : i64, scratch_operands = 0 : i64, tpu.core_type = #tpu.core_type<tc>, window_params = [{transform_indices = @transform_0, window_bounds = array<i64: 16, 128>}, {transform_indices = @transform_1, window_bounds = array<i64: 16, 128>}]} {
    %c0 = arith.constant 0 : index
    %c0_0 = arith.constant 0 : index
    %0 = vector.load %arg1[%c0, %c0_0] : memref<16x128xf32, #tpu.memory_space<vmem>>, vector<16x128xf32>
    %cst = arith.constant 3.000000e+00 : f32
    %1 = vector.broadcast %cst : f32 to vector<16x128xf32>
    %2 = arith.addf %0, %1 : vector<16x128xf32>
    %cst_1 = arith.constant 0.000000e+00 : f32
    %cst_2 = arith.constant 6.000000e+00 : f32
    %3 = vector.broadcast %cst_1 : f32 to vector<16x128xf32>
    %4 = arith.maximumf %3, %2 : vector<16x128xf32>
    %5 = vector.broadcast %cst_2 : f32 to vector<16x128xf32>
    %6 = arith.minimumf %5, %4 : vector<16x128xf32>
    %cst_3 = arith.constant 0.166666672 : f32
    %7 = vector.broadcast %cst_3 : f32 to vector<16x128xf32>
    %8 = arith.mulf %6, %7 : vector<16x128xf32>
    %9 = arith.mulf %0, %8 : vector<16x128xf32>
    %c0_4 = arith.constant 0 : index
    %c0_5 = arith.constant 0 : index
    %10 = vector.load %arg2[%c0_4, %c0_5] : memref<16x128xf32, #tpu.memory_space<vmem>>, vector<16x128xf32>
    tpu.vector_store %arg2[%c0_4, %c0_5], %9 {strides = array<i32>} : memref<16x128xf32, #tpu.memory_space<vmem>>, vector<16x128xf32>,
    return
  }
  func.func @transform_0(%arg0: i32) -> (i32, i32) {
    %c0_i32 = arith.constant 0 : i32
    %c0_i32_0 = arith.constant 0 : i32
    return %arg0, %c0_i32 : i32, i32
  }
  func.func @transform_1(%arg0: i32) -> (i32, i32) {
    %c0_i32 = arith.constant 0 : i32
    %c0_i32_0 = arith.constant 0 : i32
    return %arg0, %c0_i32 : i32, i32
  }
}

</mosaic_0001>

<llo_original>
// kernel: tpu_custom_call.1
$region0: #{tpu_custom_call.1}
  #allocation0 [shape = 'u32[]', space=smem, size = 0x4, offset = 0x4, fixed_abs, tag = 'smem constant byte address 0x4 - core index']
  #allocation1 [shape = 'u32[72,128]{1,0:T(1,128)}', space=vmem, size = 0x9000, scoped, tag = 'internal scratch']
  %s0 = inlined_call_operand.hbm [shape: f32[16,128], index: 0, kind: input, shape index: {}]
  %s1 = inlined_call_operand.hbm [shape: f32[16,128], index: 1, kind: output, shape index: {}]
  %s2 = sld [smem:[#allocation0]]
  $region18: #{tpu_custom_call.1} parent=0
    _
  %s4 = ssub.s32 1, %s2
  %s5 = scalar_select 0, %s4, %s2
  $region1: #{tpu_custom_call.1} parent=0
    #allocation2 [shape = 'u8[8192]{0}', space=vmem, size = 0x2000, scoped, tag = 'input window, operand 0, single buffered']
    #allocation3 [shape = 's32[1]{0}', space=sflag, size = 0x4, scoped, tag = 'scoped memory for tpu_custom_call.1']
    #allocation4 [shape = 's32[1]{0}', space=sflag, size = 0x4, scoped, tag = 'scoped memory for tpu_custom_call.1']
    #allocation5 [shape = 'u8[8192]{0}', space=vmem, size = 0x2000, scoped, tag = 'output window, operand 0, single buffered']
    %6 = vsyncpa [#allocation3], 0
    %7 = vsyncpa [#allocation4], 0
    // Predicated region
    $region2: #{tpu_custom_call.1} parent=1 // pred_check
      _
    $region3: #{tpu_custom_call.1} parent=1 // pred_check_branch
      %9 = sbr.rel (0) target = $region5
    $region4: #{tpu_custom_call.1} parent=1 // pred_region
      %11 = vsyncadd [#allocation3], 0
      %s12 = sshll.u32 %s0, 4
      %s13 = int_to_ptr.hbm [resolvable:$true] %s12
      %s14 = sshll.u32 [#allocation2], 4
      %s15 = int_to_ptr.vmem [resolvable:$true] %s14
      %20 = dma.hbm_to_vmem [thread:$0]  %s13, 256, %s15, [#allocation3], 128, 128, 8
    $region5: #{tpu_custom_call.1} parent=1 // pred_fallthru
      _
    // Predicated region
    $region6: #{tpu_custom_call.1} parent=1 // pred_check
      _
    $region7: #{tpu_custom_call.1} parent=1 // pred_check_branch
      %22 = sbr.rel (0) target = $region9
    $region8: #{tpu_custom_call.1} parent=1 // pred_region
      %24 = dma.done [#allocation3], 256
    $region9: #{tpu_custom_call.1} parent=1 // pred_fallthru
      _
    %v25 = vld [vmem:[#allocation2] sm:$0xff]
    %v26 = vld [vmem:[#allocation2 + $0x8] sm:$0xff]
    %v27 = vadd.f32 %v25, 3.0
    %v28 = vadd.f32 %v26, 3.0
    %v29 = vmax.f32 %v27, 0.0
    %v30 = vmax.f32 %v28, 0.0
    %v31 = vmin.f32 %v29, 6.0
    %v32 = vmin.f32 %v30, 6.0
    %v33 = vmul.f32 %v31, 0.16666667
    %v34 = vmul.f32 %v32, 0.16666667
    %v35 = vmul.f32 %v25, %v33
    %v36 = vmul.f32 %v26, %v34
    %37 = vst [vmem:[#allocation5] sm:$0xff] %v35
    %38 = vst [vmem:[#allocation5 + $0x8] sm:$0xff] %v36
    // Predicated region
    $region10: #{tpu_custom_call.1} parent=1 // pred_check
      _
    $region11: #{tpu_custom_call.1} parent=1 // pred_check_branch
      %40 = sbr.rel (0) target = $region13
    $region12: #{tpu_custom_call.1} parent=1 // pred_region
      %42 = vsyncadd [#allocation4], 0
      %s43 = sshll.u32 [#allocation5], 4
      %s44 = int_to_ptr.vmem [resolvable:$true] %s43
      %s45 = sshll.u32 %s1, 4
      %s46 = int_to_ptr.hbm [resolvable:$true] %s45
      %51 = dma.vmem_to_hbm [thread:$0]  %s44, 256, %s46, [#allocation4], 128, 128, 8
    $region13: #{tpu_custom_call.1} parent=1 // pred_fallthru
      _
    // Predicated region
    $region14: #{tpu_custom_call.1} parent=1 // pred_check
      _
    $region15: #{tpu_custom_call.1} parent=1 // pred_check_branch
      %53 = sbr.rel (0) target = $region17
    $region16: #{tpu_custom_call.1} parent=1 // pred_region
      %55 = dma.done [#allocation4], 256
    $region17: #{tpu_custom_call.1} parent=1 // pred_fallthru
      _
    %56 = vsyncpa [#allocation3], 1
    %57 = vsyncpa [#allocation4], 1

</llo_original>
